<compile_context>
chip_gen: v7x
topology: tpu7x:2x2x1
jax: 0.10.0
libtpu: 0.0.40
codegen_flags: <defaults>
</compile_context>

<pallas_src>
import functools

import jax
import jax.numpy as jnp
from jax.experimental import pallas as pl
from jax.experimental.pallas import tpu as pltpu


def _round_up(x, m):
    return (x + m - 1) // m * m


@functools.lru_cache(maxsize=1)
def _roll_sign():
    """pltpu.roll is documented to match jnp.roll (positive shift moves data to higher
    indices).  Probe once, eagerly, so a convention change can never silently mirror
    the convolution taps (the reference check in __main__ would also catch it)."""
    def _k(x_ref, o_ref):
        o_ref[...] = pltpu.roll(x_ref[...], 1, 1)

    x = jnp.arange(8 * 128, dtype=jnp.float32).reshape(8, 128)
    y = pl.pallas_call(_k, out_shape=jax.ShapeDtypeStruct((8, 128), jnp.float32))(x)
    matches_jnp = bool(y[0, 1] == 0.0)           # jnp.roll([0..127], 1)[1] == 0
    return -1 if matches_jnp else 1


# ----------------------------------------------------------------------------
# Fused conv + norm + activation (+ residual) kernel
# ----------------------------------------------------------------------------
def _conv_fused_kernel(*refs, k, H, W, Wp, cout, norm, act, has_residual, eps, roll_sign):
    """Processes one batch element.

    x_ref : (1, Cin, Wf)   bf16, zero-padded image flattened over (Hp, Wp), Wf % 128 == 0
    w_ref : (k*k, Cout, Cin) bf16, tap t = dy*k + dx holds weight[:, :, dy, dx]
    b_ref : (Cout, 1) f32
    [sc_ref, sh_ref : (1, Cout, 1) f32]      affine of AdaIN / LayerNorm
    [m_ref : (1, Wf) f32]                    1.0 on columns that are real output pixels
    [r_ref : (1, Cout, Wf)]                  residual in the same "wide" layout
    o_ref : (1, Cout, Wf)

    Output at wide column j = h*Wp + w is conv(x)[h, w]; other columns are don't-care.
    """
    it = iter(refs)
    x_ref = next(it)
    w_ref = next(it)
    b_ref = next(it)
    sc_ref = sh_ref = m_ref = r_ref = None
    if norm != "none":
        sc_ref = next(it)
        sh_ref = next(it)
        m_ref = next(it)
    if has_residual:
        r_ref = next(it)
    o_ref = next(it)

    xv = x_ref[0]                                  # (Cin, Wf) bf16, stays in VMEM
    Wf = xv.shape[-1]

    # Direct convolution: out[:, j] = sum_taps W_tap @ x_flat[:, j + dy*Wp + dx].
    # Each tap is a lane shift (pltpu.roll, XLU slot -> overlaps the MXU) + an MXU
    # matmul with the big flat spatial axis on lanes; accumulate in f32.
    acc = jnp.zeros((cout, Wf), jnp.float32)
    for dy in range(k):
        for dx in range(k):
            s = dy * Wp + dx
            shifted = xv if s == 0 else pltpu.roll(xv, (roll_sign * s) % Wf, 1)
            acc = acc + jnp.dot(w_ref[dy * k + dx], shifted,
                                preferred_element_type=jnp.float32)
    y = acc + b_ref[...]                           # (Cout, Wf) + (Cout, 1)

    if norm == "adain":
        # F.batch_norm(training=True): per-(b, c) mean / biased var over spatial dims.
        mask = m_ref[...]                          # (1, Wf)
        n = float(H * W)
        mean = jnp.sum(y * mask, axis=1, keepdims=True) * (1.0 / n)
        d = y - mean
        var = jnp.sum(d * d * mask, axis=1, keepdims=True) * (1.0 / n)
        y = d * jax.lax.rsqrt(var + eps)
        y = y * sc_ref[0] + sh_ref[0]
    elif norm == "ln":
        # MUNIT LayerNorm: per-sample mean / *unbiased* std over C*H*W, divide by
        # (std + eps), per-channel affine.
        mask = m_ref[...]
        n = float(cout * H * W)
        mean = jnp.sum(y * mask, keepdims=True) * (1.0 / n)
        d = y - mean
        var = jnp.sum(d * d * mask, keepdims=True) * (1.0 / (n - 1.0))
        y = d * (1.0 / (jnp.sqrt(var) + eps))
        y = y * sc_ref[0] + sh_ref[0]

    if act == "relu":
        y = jnp.maximum(y, 0.0)
    elif act == "tanh":
        y = jnp.tanh(y)

    if has_residual:
        y = y + r_ref[0].astype(jnp.float32)

    o_ref[0] = y.astype(o_ref.dtype)


# ----------------------------------------------------------------------------
# Host-side glue (pure data movement) + pallas_call wrapper
# ----------------------------------------------------------------------------
def _pad_flat_lanes(x, p):
    """(B, C, H, W) -> zero-pad spatially by p, flatten (Hp, Wp), pad flat axis to a
    multiple of 128 so every in-kernel vector op / store is lane-aligned."""
    B, C, H, W = x.shape
    Hp, Wp = H + 2 * p, W + 2 * p
    xp = jnp.pad(x, ((0, 0), (0, 0), (p, p), (p, p)))
    flat = xp.reshape(B, C, Hp * Wp)
    Wf = _round_up(Hp * Wp, 128)
    if Wf > Hp * Wp:
        flat = jnp.pad(flat, ((0, 0), (0, 0), (0, Wf - Hp * Wp)))
    return flat, Hp, Wp, Wf


def _to_wide(x, Wp, Wf):
    """(B, C, H, W) -> the kernel's 'wide' layout (B, C, Wf) with value at j=h*Wp+w."""
    B, C, H, W = x.shape
    xw = jnp.pad(x, ((0, 0), (0, 0), (0, 0), (0, Wp - W))).reshape(B, C, H * Wp)
    return jnp.pad(xw, ((0, 0), (0, 0), (0, Wf - H * Wp)))


def conv_block(x, w_taps, bias, k, *, norm="none", act="none", scale=None, shift=None,
               residual=None, out_dtype=jnp.bfloat16, eps=1e-5):
    """Fused Conv2dBlock.  x: (B, Cin, H, W); w_taps: (k*k, Cout, Cin) bf16."""
    B, Cin, H, W = x.shape
    Cout = w_taps.shape[1]
    p = k // 2
    xf, Hp, Wp, Wf = _pad_flat_lanes(x.astype(jnp.bfloat16), p)

    in_specs = [
        pl.BlockSpec((1, Cin, Wf), lambda b: (b, 0, 0)),        # streamed activation
        pl.BlockSpec((k * k, Cout, Cin), lambda b: (0, 0, 0)),  # resident weights
        pl.BlockSpec((Cout, 1), lambda b: (0, 0)),              # bias
    ]
    args = [xf, w_taps.astype(jnp.bfloat16), bias.reshape(Cout, 1).astype(jnp.float32)]

    if norm == "adain":   # per-(batch, channel) affine
        args.append(scale.reshape(B, Cout, 1).astype(jnp.float32))
        args.append(shift.reshape(B, Cout, 1).astype(jnp.float32))
        in_specs.append(pl.BlockSpec((1, Cout, 1), lambda b: (b, 0, 0)))
        in_specs.append(pl.BlockSpec((1, Cout, 1), lambda b: (b, 0, 0)))
    elif norm == "ln":    # per-channel affine, shared over batch
        args.append(scale.reshape(1, Cout, 1).astype(jnp.float32))
        args.append(shift.reshape(1, Cout, 1).astype(jnp.float32))
        in_specs.append(pl.BlockSpec((1, Cout, 1), lambda b: (0, 0, 0)))
        in_specs.append(pl.BlockSpec((1, Cout, 1), lambda b: (0, 0, 0)))
    if norm != "none":
        j = jnp.arange(Wf, dtype=jnp.int32)
        mask = ((j < H * Wp) & (j % Wp < W)).astype(jnp.float32).reshape(1, Wf)
        args.append(mask)
        in_specs.append(pl.BlockSpec((1, Wf), lambda b: (0, 0)))

    has_res = residual is not None
    if has_res:
        args.append(_to_wide(residual, Wp, Wf))
        in_specs.append(pl.BlockSpec((1, Cout, Wf), lambda b: (b, 0, 0)))

    kernel = functools.partial(
        _conv_fused_kernel, k=k, H=H, W=W, Wp=Wp, cout=Cout, norm=norm, act=act,
        has_residual=has_res, eps=eps, roll_sign=_roll_sign())

    out = pl.pallas_call(
        kernel,
        out_shape=jax.ShapeDtypeStruct((B, Cout, Wf), out_dtype),
        grid_spec=pltpu.PrefetchScalarGridSpec(
            num_scalar_prefetch=0,
            grid=(B,),
            in_specs=in_specs,
            out_specs=pl.BlockSpec((1, Cout, Wf), lambda b: (b, 0, 0)),
        ),
        compiler_params=pltpu.CompilerParams(dimension_semantics=("parallel",)),
    )(*args)

    # Drop the padded columns of the wide layout: j = h*Wp + w, keep w < W.
    out = out[:, :, :H * Wp].reshape(B, Cout, H, Wp)[:, :, :, :W]
    return out


# ----------------------------------------------------------------------------
# Parameter init (deterministic, synthetic) and decoder forward
# ----------------------------------------------------------------------------
def init_params(key, n_res, n_upsample, dim, output_dim, batch):
    keys = iter(jax.random.split(key, 64))

    def conv_taps(cin, cout, k):
        # torch layout (Cout, Cin, kh, kw) -> taps (kh*kw, Cout, Cin), bf16 for the MXU.
        w = jax.random.normal(next(keys), (cout, cin, k, k), jnp.float32)
        w = w / float(cin * k * k) ** 0.5
        b = 0.01 * jax.random.normal(next(keys), (cout,), jnp.float32)
        taps = jnp.transpose(w, (2, 3, 0, 1)).reshape(k * k, cout, cin)
        return taps.astype(jnp.bfloat16), b

    params = {"resblocks": [], "ups": []}
    for _ in range(n_res):
        rb = {}
        rb["w1"], rb["b1"] = conv_taps(dim, dim, 3)
        rb["w2"], rb["b2"] = conv_taps(dim, dim, 3)
        # AdaIN affine params are assigned externally in MUNIT (length = batch*channels)
        rb["adain1_w"] = 1.0 + 0.1 * jax.random.normal(next(keys), (batch * dim,), jnp.float32)
        rb["adain1_b"] = 0.1 * jax.random.normal(next(keys), (batch * dim,), jnp.float32)
        rb["adain2_w"] = 1.0 + 0.1 * jax.random.normal(next(keys), (batch * dim,), jnp.float32)
        rb["adain2_b"] = 0.1 * jax.random.normal(next(keys), (batch * dim,), jnp.float32)
        params["resblocks"].append(rb)

    d = dim
    for _ in range(n_upsample):
        u = {}
        u["w"], u["b"] = conv_taps(d, d // 2, 5)
        u["gamma"] = jax.random.uniform(next(keys), (d // 2,), jnp.float32)  # torch .uniform_()
        u["beta"] = jnp.zeros((d // 2,), jnp.float32)
        params["ups"].append(u)
        d //= 2

    params["final_w"], params["final_b"] = conv_taps(d, output_dim, 7)
    return params


def decoder_forward(x_nchw, params):
    x = x_nchw.astype(jnp.float32)

    # ResBlocks: conv3x3 + AdaIN + ReLU, conv3x3 + AdaIN + residual  (2 fused kernels each)
    for rb in params["resblocks"]:
        residual = x
        h = conv_block(x, rb["w1"], rb["b1"], 3, norm="adain", act="relu",
                       scale=rb["adain1_w"], shift=rb["adain1_b"])
        x = conv_block(h, rb["w2"], rb["b2"], 3, norm="adain", act="none",
                       scale=rb["adain2_w"], shift=rb["adain2_b"], residual=residual)

    # Upsample x2 (nearest) -> conv5x5 + LayerNorm + ReLU (1 fused kernel each)
    for u in params["ups"]:
        # TODO(synk): fold the nearest-neighbour 2x upsample into the conv kernel's tap
        # indexing (sub-pixel / per-parity taps) instead of materializing the 4x
        # activation with jnp.repeat.
        x = jnp.repeat(jnp.repeat(x, 2, axis=2), 2, axis=3)
        x = conv_block(x, u["w"], u["b"], 5, norm="ln", act="relu",
                       scale=u["gamma"], shift=u["beta"])

    # Final conv7x7 + tanh
    x = conv_block(x, params["final_w"], params["final_b"], 7, norm="none", act="tanh",
                   out_dtype=jnp.float32)
    return x   # NCHW


# ----------------------------------------------------------------------------
# Pure-JAX reference (mirrors the kernel's bf16 streaming) for correctness check
# ----------------------------------------------------------------------------
def _ref_conv_block(x, taps, bias, k, *, norm="none", act="none", scale=None, shift=None,
                    residual=None, eps=1e-5):
    B, Cin, H, W = x.shape
    Cout = taps.shape[1]
    p = k // 2
    # taps[dy*k+dx, o, i] == w[o, i, dy, dx]  ->  reconstruct OIHW weights in f32.
    w = jnp.transpose(taps.astype(jnp.float32).reshape(k, k, Cout, Cin), (2, 3, 0, 1))
    xb = x.astype(jnp.bfloat16).astype(jnp.float32)      # kernel streams activations bf16
    y = jax.lax.conv_general_dilated(xb, w, window_strides=(1, 1),
                                     padding=[(p, p), (p, p)],
                                     dimension_numbers=("NCHW", "OIHW", "NCHW"))
    y = y + bias.reshape(1, Cout, 1, 1)
    if norm == "adain":
        mean = jnp.mean(y, axis=(2, 3), keepdims=True)
        var = jnp.mean(jnp.square(y - mean), axis=(2, 3), keepdims=True)   # biased
        y = (y - mean) / jnp.sqrt(var + eps)
        y = y * scale.reshape(B, Cout, 1, 1) + shift.reshape(B, Cout, 1, 1)
    elif norm == "ln":
        n = Cout * y.shape[2] * y.shape[3]
        mean = jnp.mean(y, axis=(1, 2, 3), keepdims=True)
        var = jnp.sum(jnp.square(y - mean), axis=(1, 2, 3), keepdims=True) / (n - 1)
        y = (y - mean) / (jnp.sqrt(var) + eps)
        y = y * scale.reshape(1, Cout, 1, 1) + shift.reshape(1, Cout, 1, 1)
    if act == "relu":
        y = jnp.maximum(y, 0.0)
    elif act == "tanh":
        y = jnp.tanh(y)
    if residual is not None:
        y = y + residual.astype(jnp.float32)
    return y


def decoder_reference(x_nchw, params):
    def q(v):  # emulate the kernel's bf16 inter-block stores
        return v.astype(jnp.bfloat16).astype(jnp.float32)

    x = x_nchw.astype(jnp.float32)
    for rb in params["resblocks"]:
        residual = x
        h = q(_ref_conv_block(x, rb["w1"], rb["b1"], 3, norm="adain", act="relu",
                              scale=rb["adain1_w"], shift=rb["adain1_b"]))
        x = q(_ref_conv_block(h, rb["w2"], rb["b2"], 3, norm="adain", act="none",
                              scale=rb["adain2_w"], shift=rb["adain2_b"], residual=residual))
    for u in params["ups"]:
        x = jnp.repeat(jnp.repeat(x, 2, axis=2), 2, axis=3)
        x = q(_ref_conv_block(x, u["w"], u["b"], 5, norm="ln", act="relu",
                              scale=u["gamma"], shift=u["beta"]))
    return _ref_conv_block(x, params["final_w"], params["final_b"], 7,
                           norm="none", act="tanh")


if __name__ == "__main__":
    B, dim, Hs, n_res, n_up, out_dim = 2, 32, 16, 2, 2, 3
    key = jax.random.PRNGKey(0)
    kx, kp = jax.random.split(key)
    x = jax.random.normal(kx, (B, dim, Hs, Hs), jnp.float32)          # NCHW input
    params = init_params(kp, n_res, n_up, dim, out_dim, B)

    _roll_sign()  # resolve the lane-roll convention once, eagerly, outside any jit trace

    fwd = jax.jit(decoder_forward)
    y = jax.block_until_ready(fwd(x, params))

    H_out = Hs * 2 ** n_up
    assert y.shape == (B, out_dim, H_out, H_out), y.shape
    assert bool(jnp.all(jnp.isfinite(y)))
    assert bool(jnp.all(jnp.abs(y) <= 1.0 + 1e-6))  # tanh output range

    # Numerical check against the pure-JAX reference (same bf16 streaming, f32 math).
    y_ref = jax.block_until_ready(jax.jit(decoder_reference)(x, params))
    max_err = float(jnp.max(jnp.abs(y - y_ref)))
    assert max_err < 0.1, f"max abs error vs pure-JAX reference: {max_err}"

    print("KERNEL_OK")
</pallas_src>

<mosaic_0001>
module attributes {stable_mosaic.version = 11 : i64} {
  func.func @_k(%arg0: memref<8x128xf32, #tpu.memory_space<vmem>>, %arg1: memref<8x128xf32, #tpu.memory_space<vmem>>) attributes {dimension_semantics = [], scalar_prefetch = 0 : i64, scratch_operands = 0 : i64, tpu.core_type = #tpu.core_type<tc>} {
    %c0 = arith.constant 0 : index
    %c0_0 = arith.constant 0 : index
    %0 = vector.load %arg0[%c0, %c0_0] : memref<8x128xf32, #tpu.memory_space<vmem>>, vector<8x128xf32>
    %c1_i32 = arith.constant 1 : i32
    %1 = tpu.dynamic_rotate %0 by %c1_i32 dim 1 : vector<8x128xf32>, i32 -> vector<8x128xf32>
    %c0_1 = arith.constant 0 : index
    %c0_2 = arith.constant 0 : index
    %2 = vector.load %arg1[%c0_1, %c0_2] : memref<8x128xf32, #tpu.memory_space<vmem>>, vector<8x128xf32>
    tpu.vector_store %arg1[%c0_1, %c0_2], %1 {strides = array<i32>} : memref<8x128xf32, #tpu.memory_space<vmem>>, vector<8x128xf32>,
    return
  }
}

</mosaic_0001>

<llo_original>
// kernel: tpu_custom_call.1
$region0: #{tpu_custom_call.1}
  #allocation0 [shape = 'u32[]', space=smem, size = 0x4, offset = 0x4, fixed_abs, tag = 'smem constant byte address 0x4 - core index']
  #allocation1 [shape = 'u32[144,128]{1,0:T(1,128)}', space=vmem, size = 0x12000, scoped, tag = 'internal scratch']
  %s0 = inlined_call_operand.hbm [shape: f32[8,128], index: 0, kind: input, shape index: {}]
  %s1 = inlined_call_operand.hbm [shape: f32[8,128], index: 1, kind: output, shape index: {}]
  %s2 = sld [smem:[#allocation0]]
  $region18: #{tpu_custom_call.1} parent=0
    _
  %s4 = ssub.s32 1, %s2
  %s5 = scalar_select 0, %s4, %s2
  $region1: #{tpu_custom_call.1} parent=0
    #allocation2 [shape = 'u8[4096]{0}', space=vmem, size = 0x1000, scoped, tag = 'input window, operand 0, single buffered']
    #allocation3 [shape = 's32[1]{0}', space=sflag, size = 0x4, scoped, tag = 'scoped memory for tpu_custom_call.1']
    #allocation4 [shape = 's32[1]{0}', space=sflag, size = 0x4, scoped, tag = 'scoped memory for tpu_custom_call.1']
    #allocation5 [shape = 'u8[4096]{0}', space=vmem, size = 0x1000, scoped, tag = 'output window, operand 0, single buffered']
    %6 = vsyncpa [#allocation3], 0
    %7 = vsyncpa [#allocation4], 0
    // Predicated region
    $region2: #{tpu_custom_call.1} parent=1 // pred_check
      _
    $region3: #{tpu_custom_call.1} parent=1 // pred_check_branch
      %9 = sbr.rel (0) target = $region5
    $region4: #{tpu_custom_call.1} parent=1 // pred_region
      %s11 = ssub.s32 128, 128
      %12 = vsyncadd [#allocation3], %s11
      %s14 = sshll.u32 [#allocation2], 4
      %s15 = int_to_ptr.vmem [resolvable:$true] %s14
      %17 = dma.hbm_to_vmem [thread:$0]  %s0, 128, %s15, [#allocation3]
    $region5: #{tpu_custom_call.1} parent=1 // pred_fallthru
      _
    // Predicated region
    $region6: #{tpu_custom_call.1} parent=1 // pred_check
      _
    $region7: #{tpu_custom_call.1} parent=1 // pred_check_branch
      %19 = sbr.rel (0) target = $region9
    $region8: #{tpu_custom_call.1} parent=1 // pred_region
      %20 = dma.done [#allocation3], 128
    $region9: #{tpu_custom_call.1} parent=1 // pred_fallthru
      _
    %v21 = vld [vmem:[#allocation2] sm:$0xff]
    %22 = vrot.lane.b32.xlu0 %v21, 1
    %v23 = vpop.permute.xlu0 %22
    %24 = vst [vmem:[#allocation5] sm:$0xff] %v23
    // Predicated region
    $region10: #{tpu_custom_call.1} parent=1 // pred_check
      _
    $region11: #{tpu_custom_call.1} parent=1 // pred_check_branch
      %26 = sbr.rel (0) target = $region13
    $region12: #{tpu_custom_call.1} parent=1 // pred_region
      %s28 = ssub.s32 128, 128
      %29 = vsyncadd [#allocation4], %s28
      %s31 = sshll.u32 [#allocation5], 4
      %s32 = int_to_ptr.vmem [resolvable:$true] %s31
      %34 = dma.vmem_to_hbm [thread:$0]  %s32, 128, %s1, [#allocation4]
    $region13: #{tpu_custom_call.1} parent=1 // pred_fallthru
      _
    // Predicated region
    $region14: #{tpu_custom_call.1} parent=1 // pred_check
      _
    $region15: #{tpu_custom_call.1} parent=1 // pred_check_branch
      %36 = sbr.rel (0) target = $region17
    $region16: #{tpu_custom_call.1} parent=1 // pred_region
      %37 = dma.done [#allocation4], 128
    $region17: #{tpu_custom_call.1} parent=1 // pred_fallthru
      _
    %38 = vsyncpa [#allocation3], 1
    %39 = vsyncpa [#allocation4], 1

</llo_original>
